<compile_context>
chip_gen: v5e
topology: v5e:2x2
jax: 0.10.0
libtpu: 0.0.40
codegen_flags: <defaults>
</compile_context>

<pallas_src>
import jax
import jax.numpy as jnp
from jax.experimental import pallas as pl
from jax.experimental.pallas import tpu as pltpu

_LANES = 128
_MAX_TILE_ROWS = 512          # 512 x 128 f32 block = 256 KiB
_KERNEL_MIN_N = 8192          # below this, a Pallas call is pure overhead


def _linear_kernel(wb_ref, x_ref, o_ref):
    # wb_ref: SMEM f32[2] = [weight, bias]; x_ref/o_ref: VMEM (tile_rows, 128).
    w = wb_ref[0]
    b = wb_ref[1]
    o_ref[...] = x_ref[...] * w + b


def _round_up(x, m):
    return ((x + m - 1) // m) * m


def exam_score_forward(x, weight, bias, *, force_kernel=False):
    """x: [N, 1] f32, weight: [1, 1] f32, bias: [1] f32 -> [N, 1] f32."""
    n, f_in = x.shape
    assert f_in == 1 and weight.shape == (1, 1) and bias.shape == (1,)

    w = weight[0, 0]
    b = bias[0]

    # At small N the fused XLA elementwise op beats any custom kernel
    # (~0.35 us/grid-step + custom-call launch >> 1 VPU bundle of compute).
    if not force_kernel and n < _KERNEL_MIN_N:
        return x * w + b

    # ---- Lane-dense repack: [N, 1] -> [rows_padded, 128] ----
    rows = pl.cdiv(n, _LANES)
    rows = _round_up(rows, 8)                       # sublane-align
    tile_rows = min(_MAX_TILE_ROWS, rows)           # multiple of 8 by construction
    rows_padded = _round_up(rows, tile_rows)
    n_padded = rows_padded * _LANES

    x_flat = x.reshape(-1)
    x_flat = jnp.pad(x_flat, (0, n_padded - n))
    x2d = x_flat.reshape(rows_padded, _LANES)

    wb = jnp.concatenate([weight.reshape(-1), bias.reshape(-1)]).astype(x.dtype)

    num_blocks = rows_padded // tile_rows

    y2d = pl.pallas_call(
        _linear_kernel,
        out_shape=jax.ShapeDtypeStruct((rows_padded, _LANES), x.dtype),
        grid_spec=pl.GridSpec(
            grid=(num_blocks,),
            in_specs=[
                pl.BlockSpec(memory_space=pltpu.MemorySpace.SMEM),      # [w, b]
                pl.BlockSpec((tile_rows, _LANES), lambda i: (i, 0)),    # x slab
            ],
            out_specs=pl.BlockSpec((tile_rows, _LANES), lambda i: (i, 0)),
        ),
        compiler_params=pltpu.CompilerParams(
            dimension_semantics=("parallel",),      # lets v7x use both TCs
        ),
    )(wb, x2d)

    return y2d.reshape(-1)[:n].reshape(n, 1)


if __name__ == "__main__":
    key = jax.random.PRNGKey(0)
    kx, kw, kb, kx2 = jax.random.split(key, 4)

    # Deterministic parameters (shapes from nn.Linear(1, 1)).
    weight = jax.random.uniform(kw, (1, 1), jnp.float32, -1.0, 1.0)
    bias = jax.random.uniform(kb, (1,), jnp.float32, -1.0, 1.0)

    # Small example input consistent with the module: batch of 8 scalar scores.
    x = jax.random.normal(kx, (8, 1), jnp.float32)
    y = exam_score_forward(x, weight, bias, force_kernel=True)
    y = jax.block_until_ready(y)
    y_ref = x @ weight.T + bias
    assert y.shape == (8, 1)
    assert jnp.allclose(y, y_ref, atol=1e-6, rtol=1e-6)

    # Larger ragged case to exercise the multi-block, lane-dense tiled path.
    n_big = 70_000
    x_big = jax.random.normal(kx2, (n_big, 1), jnp.float32)
    y_big = exam_score_forward(x_big, weight, bias, force_kernel=True)
    y_big = jax.block_until_ready(y_big)
    y_big_ref = x_big @ weight.T + bias
    assert y_big.shape == (n_big, 1)
    assert jnp.allclose(y_big, y_big_ref, atol=1e-5, rtol=1e-5)

    print("KERNEL_OK")
</pallas_src>

<mosaic_0001>
module attributes {stable_mosaic.version = 11 : i64} {
  func.func @_linear_kernel(%arg0: i32, %arg1: memref<2xf32, #tpu.memory_space<smem>>, %arg2: memref<8x128xf32, #tpu.memory_space<vmem>>, %arg3: memref<8x128xf32, #tpu.memory_space<vmem>>) attributes {dimension_semantics = [#tpu.dimension_semantics<parallel>], iteration_bounds = array<i64: 1>, scalar_prefetch = 0 : i64, scratch_operands = 0 : i64, tpu.core_type = #tpu.core_type<tc>, window_params = [{transform_indices = @transform_0, window_bounds = array<i64: 2>}, {transform_indices = @transform_1, window_bounds = array<i64: 8, 128>}, {transform_indices = @transform_2, window_bounds = array<i64: 8, 128>}]} {
    %c0 = arith.constant 0 : index
    %0 = memref.load %arg1[%c0] : memref<2xf32, #tpu.memory_space<smem>>
    %c1 = arith.constant 1 : index
    %1 = memref.load %arg1[%c1] : memref<2xf32, #tpu.memory_space<smem>>
    %c0_0 = arith.constant 0 : index
    %c0_1 = arith.constant 0 : index
    %2 = vector.load %arg2[%c0_0, %c0_1] : memref<8x128xf32, #tpu.memory_space<vmem>>, vector<8x128xf32>
    %3 = vector.broadcast %0 : f32 to vector<8x128xf32>
    %4 = arith.mulf %2, %3 : vector<8x128xf32>
    %5 = vector.broadcast %1 : f32 to vector<8x128xf32>
    %6 = arith.addf %4, %5 : vector<8x128xf32>
    %c0_2 = arith.constant 0 : index
    %c0_3 = arith.constant 0 : index
    %7 = vector.load %arg3[%c0_2, %c0_3] : memref<8x128xf32, #tpu.memory_space<vmem>>, vector<8x128xf32>
    tpu.vector_store %arg3[%c0_2, %c0_3], %6 {strides = array<i32>} : memref<8x128xf32, #tpu.memory_space<vmem>>, vector<8x128xf32>,
    return
  }
  func.func @transform_0(%arg0: i32) -> i32 {
    %c0_i32 = arith.constant 0 : i32
    %c0_i32_0 = arith.constant 0 : i32
    return %c0_i32 : i32
  }
  func.func @transform_1(%arg0: i32) -> (i32, i32) {
    %c0_i32 = arith.constant 0 : i32
    %c0_i32_0 = arith.constant 0 : i32
    return %arg0, %c0_i32 : i32, i32
  }
  func.func @transform_2(%arg0: i32) -> (i32, i32) {
    %c0_i32 = arith.constant 0 : i32
    %c0_i32_0 = arith.constant 0 : i32
    return %arg0, %c0_i32 : i32, i32
  }
}

</mosaic_0001>

<llo_original>
// kernel: tpu_custom_call.1
$region0: #{tpu_custom_call.1}
  #allocation0 [shape = 'u32[]', space=smem, size = 0x4, offset = 0x4, fixed_abs, tag = 'smem constant byte address 0x4 - core index']
  #allocation1 [shape = 'u32[72,128]{1,0:T(1,128)}', space=vmem, size = 0x9000, scoped, tag = 'internal scratch']
  %s0 = inlined_call_operand.hbm [shape: f32[2], index: 0, kind: input, shape index: {}]
  %s1 = inlined_call_operand.hbm [shape: f32[8,128], index: 1, kind: input, shape index: {}]
  %s2 = inlined_call_operand.hbm [shape: f32[8,128], index: 2, kind: output, shape index: {}]
  %s3 = sld [smem:[#allocation0]]
  $region26: #{tpu_custom_call.1} parent=0
    _
  %s5 = ssub.s32 1, %s3
  %s6 = scalar_select 0, %s5, %s3
  $region1: #{tpu_custom_call.1} parent=0
    #allocation2 [shape = 'u8[512]{0}', space=smem, size = 0x200, scoped, tag = 'input window, operand 0, single buffered']
    #allocation3 [shape = 's32[1]{0}', space=sflag, size = 0x4, scoped, tag = 'scoped memory for tpu_custom_call.1']
    #allocation4 [shape = 's32[1]{0}', space=sflag, size = 0x4, scoped, tag = 'scoped memory for tpu_custom_call.1']
    #allocation5 [shape = 's32[1]{0}', space=sflag, size = 0x4, scoped, tag = 'scoped memory for tpu_custom_call.1']
    #allocation6 [shape = 'u8[4096]{0}', space=vmem, size = 0x1000, scoped, tag = 'input window, operand 1, single buffered']
    #allocation7 [shape = 'u8[4096]{0}', space=vmem, size = 0x1000, scoped, tag = 'output window, operand 0, single buffered']
    %7 = vsyncpa [#allocation5], 0
    %8 = vsyncpa [#allocation3], 0
    %9 = vsyncpa [#allocation4], 0
    // Predicated region
    $region2: #{tpu_custom_call.1} parent=1 // pred_check
      _
    $region3: #{tpu_custom_call.1} parent=1 // pred_check_branch
      %11 = sbr.rel (0) target = $region5
    $region4: #{tpu_custom_call.1} parent=1 // pred_region
      %13 = vsyncadd [#allocation5], 0
      %s15 = sshll.u32 %s0, 4
      %s16 = int_to_ptr.hbm [resolvable:$true] %s15
      %18 = dma.hbm_to_smem %s16, 16, [#allocation2], [#allocation5]
    $region5: #{tpu_custom_call.1} parent=1 // pred_fallthru
      _
    // Predicated region
    $region6: #{tpu_custom_call.1} parent=1 // pred_check
      _
    $region7: #{tpu_custom_call.1} parent=1 // pred_check_branch
      %20 = sbr.rel (0) target = $region9
    $region8: #{tpu_custom_call.1} parent=1 // pred_region
      %22 = vsyncadd [#allocation3], 0
      %s24 = sshll.u32 %s1, 4
      %s25 = int_to_ptr.hbm [resolvable:$true] %s24
      %s26 = sshll.u32 [#allocation6], 4
      %s27 = int_to_ptr.vmem [resolvable:$true] %s26
      %29 = dma.hbm_to_vmem [thread:$0]  %s25, 128, %s27, [#allocation3]
    $region9: #{tpu_custom_call.1} parent=1 // pred_fallthru
      _
    // Predicated region
    $region10: #{tpu_custom_call.1} parent=1 // pred_check
      _
    $region11: #{tpu_custom_call.1} parent=1 // pred_check_branch
      %31 = sbr.rel (0) target = $region13
    $region12: #{tpu_custom_call.1} parent=1 // pred_region
      %33 = dma.done [#allocation5], 16
    $region13: #{tpu_custom_call.1} parent=1 // pred_fallthru
      _
    // Predicated region
    $region14: #{tpu_custom_call.1} parent=1 // pred_check
      _
    $region15: #{tpu_custom_call.1} parent=1 // pred_check_branch
      %35 = sbr.rel (0) target = $region17
    $region16: #{tpu_custom_call.1} parent=1 // pred_region
      %37 = dma.done [#allocation3], 128
    $region17: #{tpu_custom_call.1} parent=1 // pred_fallthru
      _
    %38 = sfence
    %s39 = sld [smem:[#allocation2]]
    %s40 = sld [smem:[#allocation2 + $0x1]]
    %v41 = vld [vmem:[#allocation6] sm:$0xff]
    %v42 = vstv %s39
    %v43 = vmul.f32 %v41, %v42
    %v44 = vstv %s40
    %v45 = vadd.f32 %v43, %v44
    %46 = vst [vmem:[#allocation7] sm:$0xff] %v45
    // Predicated region
    $region18: #{tpu_custom_call.1} parent=1 // pred_check
      _
    $region19: #{tpu_custom_call.1} parent=1 // pred_check_branch
      %48 = sbr.rel (0) target = $region21
    $region20: #{tpu_custom_call.1} parent=1 // pred_region
      %50 = vsyncadd [#allocation4], 0
      %s52 = sshll.u32 [#allocation7], 4
      %s53 = int_to_ptr.vmem [resolvable:$true] %s52
      %s54 = sshll.u32 %s2, 4
      %s55 = int_to_ptr.hbm [resolvable:$true] %s54
      %57 = dma.vmem_to_hbm [thread:$0]  %s53, 128, %s55, [#allocation4]
    $region21: #{tpu_custom_call.1} parent=1 // pred_fallthru
      _
    // Predicated region
    $region22: #{tpu_custom_call.1} parent=1 // pred_check
      _
    $region23: #{tpu_custom_call.1} parent=1 // pred_check_branch
      %59 = sbr.rel (0) target = $region25
    $region24: #{tpu_custom_call.1} parent=1 // pred_region
      %61 = dma.done [#allocation4], 128
    $region25: #{tpu_custom_call.1} parent=1 // pred_fallthru
      _
    %62 = vsyncpa [#allocation3], 1
    %63 = vsyncpa [#allocation4], 1
    %64 = vsyncpa [#allocation5], 1

</llo_original>
